<compile_context>
chip_gen: v7x
topology: tpu7x:2x2x1
jax: 0.10.0
libtpu: 0.0.40
codegen_flags: <defaults>
</compile_context>

<pallas_src>
import jax
import jax.numpy as jnp
from jax.experimental import pallas as pl
from jax.experimental.pallas import tpu as pltpu


# ---------------------------------------------------------------------------
# Pallas kernel:
#   out = h @ W_lin + b_lin
#         + OneHot(scatter) @ stack_k[ (1+eps_k) * prod_i sigmoid(x[k,i] @ W_k + b_k) ]
# ---------------------------------------------------------------------------
def gnn_layer_kernel(h_ref, w_lin_ref, b_lin_ref,
                     xw_ref, w_bd_ref, b_bd_ref,
                     scat_ref, eps_ref, out_ref):
    N, F_out = out_ref.shape
    K = eps_ref.shape[0]
    KP = scat_ref.shape[1]
    P = KP // K
    t = xw_ref.shape[0] // P

    # h3 = self.linear(h)   (bf16 operands, f32 accumulation, f32 bias)
    out = jnp.dot(h_ref[...], w_lin_ref[...],
                  preferred_element_type=jnp.float32) + b_lin_ref[...]

    # All K keys x all t positions in ONE block-diagonal matmul:
    #   z[i*P + p, k*F_out:(k+1)*F_out] = x[k, i, p, :] @ W_t[k] + b_t[k]
    z = jnp.dot(xw_ref[...], w_bd_ref[...],
                preferred_element_type=jnp.float32) + b_bd_ref[...]
    s = jax.nn.sigmoid(z)                                   # (t*P, K*F_out), f32, EUP

    # combination == 'multi': product over t (statically unrolled, no ones-init).
    # Row slices start at multiples of P (multiple of 8) -> sublane-aligned, no relayout.
    h_wide = s[0:P, :]
    for i in range(1, t):
        h_wide = h_wide * s[i * P:(i + 1) * P, :]           # (P, K*F_out)

    # scalar: scatter_add is linear, so (1+eps_k) * scatter(h_k) == scatter((1+eps_k) * h_k).
    # Apply the per-key scale while re-stacking the K column blocks along the pair axis
    # (key-major, matching scat_ref layout): (P, K*F_out) -> (K*P, F_out).
    h_stack = jnp.concatenate(
        [h_wide[:, k * F_out:(k + 1) * F_out] * (1.0 + eps_ref[k]) for k in range(K)],
        axis=0)                                             # (K*P, F_out), f32

    # Fused scatter_add over ALL keys as one matmul; one-hot built in-kernel from
    # int32 indices:  onehot[n, k*P + p] = [ scatter[k, p] == n ]
    onehot = (jax.lax.broadcasted_iota(jnp.int32, (N, KP), 0)
              == scat_ref[...]).astype(jnp.float32)         # (N, K*P)
    # Kept in f32 (exact one-hot, f32 transform output) to preserve accuracy; this
    # matmul is tiny (N x K*P x F_out) so the MXU cost is negligible either way.
    out = out + jnp.dot(onehot, h_stack, preferred_element_type=jnp.float32)

    out_ref[...] = out
    # TODO(synk): F_out=32 (<128 lanes) means masked vst on the final store; padding the
    # output columns to 128 (or emitting an (N*F_out/128, 128) slab) would give unmasked
    # stores but costs an extra relayout/slice and is not worth it at these sizes.
    # TODO(synk): combination == 'sum' branch (sum of h_t then ReLU(Linear)) not exercised;
    # same fused structure with one add + relu instead of the sigmoid product.


def gnn_layer_forward(h, w_lin, b_lin, x, w_t, b_t, scatter_idx, eps):
    """h: (N,F_in); x: (K,t,P,D); w_t: (K,D,F_out); b_t: (K,1,F_out);
    scatter_idx: (K,P) int32; eps: (K,) f32."""
    N, _ = h.shape
    F_out = w_lin.shape[1]
    K, t, P, D = x.shape

    # ---- one-time wrapper-side repack (parameter prep + layout) ----
    # x_wide[i*P + p, k*D:(k+1)*D] = x[k, i, p, :]
    x_wide = jnp.concatenate(
        [jnp.concatenate([x[k, i] for k in range(K)], axis=1) for i in range(t)],
        axis=0)                                              # (t*P, K*D)
    # block-diagonal transform weight + concatenated bias
    w_bd = jnp.zeros((K * D, K * F_out), jnp.float32)
    for k in range(K):
        w_bd = w_bd.at[k * D:(k + 1) * D, k * F_out:(k + 1) * F_out].set(w_t[k])
    b_bd = jnp.concatenate([b_t[k] for k in range(K)], axis=1)   # (1, K*F_out)
    scat_flat = scatter_idx.reshape(1, K * P).astype(jnp.int32)  # key-major, matches h_stack

    # bf16 matmul operands, f32 accumulation inside the kernel
    h_bf = h.astype(jnp.bfloat16)
    w_lin_bf = w_lin.astype(jnp.bfloat16)
    x_bf = x_wide.astype(jnp.bfloat16)
    w_bd_bf = w_bd.astype(jnp.bfloat16)

    vmem = pl.BlockSpec(memory_space=pltpu.MemorySpace.VMEM)
    smem = pl.BlockSpec(memory_space=pltpu.MemorySpace.SMEM)
    # TODO(synk): for large graphs add a grid over N (tile onehot/out rows,
    # dimension_semantics=("parallel",)) with the transform result kept in VMEM scratch;
    # unnecessary at these demo sizes (whole problem is a few tens of KB, fits VMEM).
    return pl.pallas_call(
        gnn_layer_kernel,
        out_shape=jax.ShapeDtypeStruct((N, F_out), jnp.float32),
        in_specs=[vmem, vmem, vmem, vmem, vmem, vmem, vmem, smem],
        out_specs=vmem,
    )(h_bf, w_lin_bf, b_lin, x_bf, w_bd_bf, b_bd, scat_flat, eps)


# ---------------------------------------------------------------------------
# Pure-JAX f32 reference (mirrors the PyTorch forward semantics)
# ---------------------------------------------------------------------------
def gnn_layer_reference(h, w_lin, b_lin, x, w_t, b_t, scatter_idx, eps):
    out = h @ w_lin + b_lin
    K, t, P, _ = x.shape
    N = h.shape[0]
    F_out = w_lin.shape[1]
    for k in range(K):
        h_temp = 1.0
        for i in range(t):
            h_temp = h_temp * jax.nn.sigmoid(x[k, i] @ w_t[k] + b_t[k])
        h_sum = jnp.zeros((N, F_out), jnp.float32).at[scatter_idx[k]].add(h_temp)
        out = out + (1.0 + eps[k]) * h_sum
    return out


if __name__ == "__main__":
    key = jax.random.PRNGKey(0)

    # ---- configuration (mirrors GNNLayer __init__) ----
    N = 64                 # number of nodes
    F_in, F_out = 16, 32   # in_features, out_features
    edge_infeat = 4        # params['edge_attr']
    t = 2                  # params['t']  (pairs case of the forward)
    keys_list = [0, 1]     # params['keys']
    K = len(keys_list)
    P = 48                 # pairs per key (padded to a common size)
    E = K * P              # number of edges
    # TODO(synk): subgraph.one_hot_length(t) is external; fixed to 12 here.
    one_hot_length = 12
    D = F_in + one_hot_length + edge_infeat

    ks = jax.random.split(key, 12)

    # ---- node / edge data ----
    h = jax.random.normal(ks[0], (N, F_in), jnp.float32)
    edge_attr = jax.random.normal(ks[1], (E, edge_infeat), jnp.float32)

    # pairs[key]: (2, P) node-index pairs; each pair gets a valid edge id in edge_feat_mat
    pairs = jax.random.randint(ks[2], (K, 2, P), 0, N)            # int32
    edge_ids = jnp.arange(E, dtype=jnp.int32).reshape(K, P)
    edge_feat_mat = -jnp.ones((N, N), jnp.int32)
    for k in range(K):
        edge_feat_mat = edge_feat_mat.at[pairs[k, 0], pairs[k, 1]].set(edge_ids[k])
    # TODO(synk): real padded data needs a validity mask for -1 / duplicate pairs.

    # degrees[key][i]: (P, one_hot_length) one-hot degree encodings
    deg_idx = jax.random.randint(ks[3], (K, t, P), 0, one_hot_length)
    degrees = jax.nn.one_hot(deg_idx, one_hot_length, dtype=jnp.float32)  # (K,t,P,oh)

    # scatter[key]: (P,) destination node per pair
    scatter_idx = jax.random.randint(ks[4], (K, P), 0, N)          # int32

    # ---- parameters (deterministic init) ----
    w_lin = 0.1 * jax.random.normal(ks[5], (F_in, F_out), jnp.float32)
    b_lin = 0.1 * jax.random.normal(ks[6], (1, F_out), jnp.float32)
    w_t = 0.1 * jax.random.normal(ks[7], (K, D, F_out), jnp.float32)
    b_t = 0.1 * jax.random.normal(ks[8], (K, 1, F_out), jnp.float32)
    eps = jnp.zeros((K,), jnp.float32)   # nn.Parameter(torch.Tensor([0])) per key

    # ---- glue: build the hstack'd inputs (t==2 branch of forward) ----
    x_list = []
    for k in range(K):
        idx = edge_feat_mat[pairs[k, 0], pairs[k, 1]]              # (P,) valid edge ids
        edge_attrs_k = edge_attr[idx]                              # (P, edge_infeat)
        xs = []
        for i in range(t):
            h_gather = h[pairs[k, i]]                              # (P, F_in)
            xs.append(jnp.concatenate([h_gather, degrees[k, i], edge_attrs_k], axis=1))
        x_list.append(jnp.stack(xs, axis=0))                       # (t, P, D)
    x = jnp.stack(x_list, axis=0)        # (K, t, P, D)

    # ---- run kernel + check ----
    out = gnn_layer_forward(h, w_lin, b_lin, x, w_t, b_t, scatter_idx, eps)
    out = jax.block_until_ready(out)
    ref = gnn_layer_reference(h, w_lin, b_lin, x, w_t, b_t, scatter_idx, eps)

    assert out.shape == (N, F_out)
    # bf16 matmul operands (f32 accumulation) -> slightly relaxed tolerance vs f32 ref
    assert jnp.allclose(out, ref, atol=3e-2, rtol=3e-2), \
        f"mismatch vs reference, max abs err {jnp.max(jnp.abs(out - ref))}"
    print("KERNEL_OK")
</pallas_src>

<mosaic_0001>
module attributes {stable_mosaic.version = 11 : i64} {
  func.func @gnn_layer_kernel(%arg0: memref<64x16xbf16, #tpu.memory_space<vmem>>, %arg1: memref<16x32xbf16, #tpu.memory_space<vmem>>, %arg2: memref<1x32xf32, #tpu.memory_space<vmem>>, %arg3: memref<96x64xbf16, #tpu.memory_space<vmem>>, %arg4: memref<64x64xbf16, #tpu.memory_space<vmem>>, %arg5: memref<1x64xf32, #tpu.memory_space<vmem>>, %arg6: memref<1x96xi32, #tpu.memory_space<vmem>>, %arg7: memref<2xf32, #tpu.memory_space<smem>>, %arg8: memref<64x32xf32, #tpu.memory_space<vmem>>) attributes {dimension_semantics = [], scalar_prefetch = 0 : i64, scratch_operands = 0 : i64, tpu.core_type = #tpu.core_type<tc>} {
    %c0 = arith.constant 0 : index
    %c0_0 = arith.constant 0 : index
    %0 = vector.load %arg0[%c0, %c0_0] : memref<64x16xbf16, #tpu.memory_space<vmem>>, vector<64x16xbf16>
    %c0_1 = arith.constant 0 : index
    %c0_2 = arith.constant 0 : index
    %1 = vector.load %arg1[%c0_1, %c0_2] : memref<16x32xbf16, #tpu.memory_space<vmem>>, vector<16x32xbf16>
    %cst = arith.constant dense<0.000000e+00> : vector<64x32xf32>
    %2 = tpu.matmul %0, %1, %cst {dimension_numbers = #tpu.dot_dimension_numbers<[1], [0], [0], [1], [0, 0, 1, 1], [], []>} : vector<64x16xbf16>, vector<16x32xbf16>, vector<64x32xf32> -> vector<64x32xf32>
    %c0_3 = arith.constant 0 : index
    %c0_4 = arith.constant 0 : index
    %3 = vector.load %arg2[%c0_3, %c0_4] : memref<1x32xf32, #tpu.memory_space<vmem>>, vector<1x32xf32>
    %4 = vector.broadcast %3 : vector<1x32xf32> to vector<64x32xf32>
    %5 = arith.addf %2, %4 : vector<64x32xf32>
    %c0_5 = arith.constant 0 : index
    %c0_6 = arith.constant 0 : index
    %6 = vector.load %arg3[%c0_5, %c0_6] : memref<96x64xbf16, #tpu.memory_space<vmem>>, vector<96x64xbf16>
    %c0_7 = arith.constant 0 : index
    %c0_8 = arith.constant 0 : index
    %7 = vector.load %arg4[%c0_7, %c0_8] : memref<64x64xbf16, #tpu.memory_space<vmem>>, vector<64x64xbf16>
    %cst_9 = arith.constant dense<0.000000e+00> : vector<96x64xf32>
    %8 = tpu.matmul %6, %7, %cst_9 {dimension_numbers = #tpu.dot_dimension_numbers<[1], [0], [0], [1], [0, 0, 1, 1], [], []>} : vector<96x64xbf16>, vector<64x64xbf16>, vector<96x64xf32> -> vector<96x64xf32>
    %c0_10 = arith.constant 0 : index
    %c0_11 = arith.constant 0 : index
    %9 = vector.load %arg5[%c0_10, %c0_11] : memref<1x64xf32, #tpu.memory_space<vmem>>, vector<1x64xf32>
    %10 = vector.broadcast %9 : vector<1x64xf32> to vector<96x64xf32>
    %11 = arith.addf %8, %10 : vector<96x64xf32>
    %12 = arith.negf %11 : vector<96x64xf32>
    %13 = math.exp %12 : vector<96x64xf32>
    %cst_12 = arith.constant 1.000000e+00 : f32
    %14 = vector.broadcast %cst_12 : f32 to vector<96x64xf32>
    %15 = arith.addf %14, %13 : vector<96x64xf32>
    %16 = arith.divf %14, %15 : vector<96x64xf32>
    %17 = vector.extract_strided_slice %16 {offsets = [0, 0], sizes = [48, 64], strides = [1, 1]} : vector<96x64xf32> to vector<48x64xf32>
    %18 = vector.extract_strided_slice %16 {offsets = [48, 0], sizes = [48, 64], strides = [1, 1]} : vector<96x64xf32> to vector<48x64xf32>
    %19 = arith.mulf %17, %18 : vector<48x64xf32>
    %20 = vector.extract_strided_slice %19 {offsets = [0, 0], sizes = [48, 32], strides = [1, 1]} : vector<48x64xf32> to vector<48x32xf32>
    %c0_13 = arith.constant 0 : index
    %21 = memref.load %arg7[%c0_13] : memref<2xf32, #tpu.memory_space<smem>>
    %cst_14 = arith.constant 1.000000e+00 : f32
    %22 = arith.addf %cst_14, %21 : f32
    %23 = vector.broadcast %22 : f32 to vector<48x32xf32>
    %24 = arith.mulf %20, %23 : vector<48x32xf32>
    %25 = vector.extract_strided_slice %19 {offsets = [0, 32], sizes = [48, 32], strides = [1, 1]} : vector<48x64xf32> to vector<48x32xf32>
    %c1 = arith.constant 1 : index
    %26 = memref.load %arg7[%c1] : memref<2xf32, #tpu.memory_space<smem>>
    %cst_15 = arith.constant 1.000000e+00 : f32
    %27 = arith.addf %cst_15, %26 : f32
    %28 = vector.broadcast %27 : f32 to vector<48x32xf32>
    %29 = arith.mulf %25, %28 : vector<48x32xf32>
    %30 = tpu.concatenate %24, %29 in 0 : vector<48x32xf32>, vector<48x32xf32> -> vector<96x32xf32>
    %31 = tpu.iota {dimensions = array<i32: 0>} : vector<64x96xi32>
    %c0_16 = arith.constant 0 : index
    %c0_17 = arith.constant 0 : index
    %32 = vector.load %arg6[%c0_16, %c0_17] : memref<1x96xi32, #tpu.memory_space<vmem>>, vector<1x96xi32>
    %33 = vector.broadcast %32 : vector<1x96xi32> to vector<64x96xi32>
    %34 = arith.cmpi eq, %31, %33 : vector<64x96xi32>
    %35 = arith.extui %34 : vector<64x96xi1> to vector<64x96xi32>
    %36 = arith.sitofp %35 : vector<64x96xi32> to vector<64x96xf32>
    %cst_18 = arith.constant dense<0.000000e+00> : vector<64x32xf32>
    %37 = tpu.matmul %36, %30, %cst_18 {dimension_numbers = #tpu.dot_dimension_numbers<[1], [0], [0], [1], [0, 0, 1, 1], [], []>} : vector<64x96xf32>, vector<96x32xf32>, vector<64x32xf32> -> vector<64x32xf32>
    %38 = arith.addf %5, %37 : vector<64x32xf32>
    %c0_19 = arith.constant 0 : index
    %c0_20 = arith.constant 0 : index
    %39 = vector.load %arg8[%c0_19, %c0_20] : memref<64x32xf32, #tpu.memory_space<vmem>>, vector<64x32xf32>
    tpu.vector_store %arg8[%c0_19, %c0_20], %38 {strides = array<i32>} : memref<64x32xf32, #tpu.memory_space<vmem>>, vector<64x32xf32>,
    return
  }
}

</mosaic_0001>

<llo_original>
// kernel: tpu_custom_call.1
$region0: #{tpu_custom_call.1}
  #allocation0 [shape = 'u32[]', space=smem, size = 0x4, offset = 0x4, fixed_abs, tag = 'smem constant byte address 0x4 - core index']
  #allocation1 [shape = 'u32[144,128]{1,0:T(1,128)}', space=vmem, size = 0x12000, scoped, tag = 'internal scratch']
  %s0 = inlined_call_operand.vmem [shape: bf16[64,16], index: 0, kind: input, shape index: {}]
  %s1 = inlined_call_operand.vmem [shape: bf16[16,32], index: 1, kind: input, shape index: {}]
  %s2 = inlined_call_operand.vmem [shape: f32[1,32], index: 2, kind: input, shape index: {}]
  %s3 = inlined_call_operand.vmem [shape: bf16[96,64], index: 3, kind: input, shape index: {}]
  %s4 = inlined_call_operand.vmem [shape: bf16[64,64], index: 4, kind: input, shape index: {}]
  %s5 = inlined_call_operand.vmem [shape: f32[1,64], index: 5, kind: input, shape index: {}]
  %s6 = inlined_call_operand.vmem [shape: s32[1,96], index: 6, kind: input, shape index: {}]
  %s7 = inlined_call_operand.vmem [shape: f32[2], index: 7, kind: input, shape index: {}]
  %s8 = inlined_call_operand.vmem [shape: f32[64,32], index: 8, kind: output, shape index: {}]
  %s9 = sld [smem:[#allocation0]]
  $region46: #{tpu_custom_call.1} parent=0
    _
  %s11 = ssub.s32 1, %s9
  %s12 = scalar_select 0, %s11, %s9
  $region1: #{tpu_custom_call.1} parent=0
    #allocation2 [shape = 'u8[512]{0}', space=smem, size = 0x200, scoped, tag = 'input window, operand 7, single buffered']
    #allocation3 [shape = 's32[1]{0}', space=sflag, size = 0x4, scoped, tag = 'scoped memory for tpu_custom_call.1']
    %13 = vsyncpa [#allocation3], 0
    // Predicated region
    $region2: #{tpu_custom_call.1} parent=1 // pred_check
      _
    $region3: #{tpu_custom_call.1} parent=1 // pred_check_branch
      %15 = sbr.rel (0) target = $region5
    $region4: #{tpu_custom_call.1} parent=1 // pred_region
      _
    $region5: #{tpu_custom_call.1} parent=1 // pred_fallthru
      _
    // Predicated region
    $region6: #{tpu_custom_call.1} parent=1 // pred_check
      _
    $region7: #{tpu_custom_call.1} parent=1 // pred_check_branch
      %17 = sbr.rel (0) target = $region9
    $region8: #{tpu_custom_call.1} parent=1 // pred_region
      _
    $region9: #{tpu_custom_call.1} parent=1 // pred_fallthru
      _
    // Predicated region
    $region10: #{tpu_custom_call.1} parent=1 // pred_check
      _
    $region11: #{tpu_custom_call.1} parent=1 // pred_check_branch
      %19 = sbr.rel (0) target = $region13
    $region12: #{tpu_custom_call.1} parent=1 // pred_region
      _
    $region13: #{tpu_custom_call.1} parent=1 // pred_fallthru
      _
    // Predicated region
    $region14: #{tpu_custom_call.1} parent=1 // pred_check
      _
    $region15: #{tpu_custom_call.1} parent=1 // pred_check_branch
      %21 = sbr.rel (0) target = $region17
    $region16: #{tpu_custom_call.1} parent=1 // pred_region
      _
    $region17: #{tpu_custom_call.1} parent=1 // pred_fallthru
      _
    // Predicated region
    $region18: #{tpu_custom_call.1} parent=1 // pred_check
      _
    $region19: #{tpu_custom_call.1} parent=1 // pred_check_branch
      %23 = sbr.rel (0) target = $region21
    $region20: #{tpu_custom_call.1} parent=1 // pred_region
      _
    $region21: #{tpu_custom_call.1} parent=1 // pred_fallthru
      _
    // Predicated region
    $region22: #{tpu_custom_call.1} parent=1 // pred_check
      _
    $region23: #{tpu_custom_call.1} parent=1 // pred_check_branch
      %25 = sbr.rel (0) target = $region25
    $region24: #{tpu_custom_call.1} parent=1 // pred_region
      _
    $region25: #{tpu_custom_call.1} parent=1 // pred_fallthru
      _
    // Predicated region
    $region26: #{tpu_custom_call.1} parent=1 // pred_check
      _
    $region27: #{tpu_custom_call.1} parent=1 // pred_check_branch
      %27 = sbr.rel (0) target = $region29
    $region28: #{tpu_custom_call.1} parent=1 // pred_region
      _
    $region29: #{tpu_custom_call.1} parent=1 // pred_fallthru
      _
    // Predicated region
    $region30: #{tpu_custom_call.1} parent=1 // pred_check
      _
    $region31: #{tpu_custom_call.1} parent=1 // pred_check_branch
      %29 = sbr.rel (0) target = $region33
    $region32: #{tpu_custom_call.1} parent=1 // pred_region
      %s31 = ssub.s32 16, 16
      %32 = vsyncadd [#allocation3], %s31
      %s34 = sshll.u32 %s7, 4
      %s35 = int_to_ptr.vmem [resolvable:$true] %s34
      %37 = dma.vmem_to_smem %s35, 16, [#allocation2], [#allocation3]
    $region33: #{tpu_custom_call.1} parent=1 // pred_fallthru
      _
    // Predicated region
    $region34: #{tpu_custom_call.1} parent=1 // pred_check
      _
    $region35: #{tpu_custom_call.1} parent=1 // pred_check_branch
      %39 = sbr.rel (0) target = $region37
    $region36: #{tpu_custom_call.1} parent=1 // pred_region
      %40 = dma.done [#allocation3], 16
    $region37: #{tpu_custom_call.1} parent=1 // pred_fallthru
      _
    %41 = sfence
    %v43 = vld [vmem:[%s0] sm:$0xf]
    %v44 = vld [vmem:[%s0 + $0x4] sm:$0xf]
    %v45 = vld [vmem:[%s0 + $0x8] sm:$0xf]
    %v46 = vld [vmem:[%s0 + $0xc] sm:$0xf]
    %v47 = vld [vmem:[%s0 + $0x10] sm:$0xf]
    %v48 = vld [vmem:[%s0 + $0x14] sm:$0xf]
    %v49 = vld [vmem:[%s0 + $0x18] sm:$0xf]
    %v50 = vld [vmem:[%s0 + $0x1c] sm:$0xf]
    %v51 = vld [vmem:[%s1] sm:$0xf]
    %v52 = vld [vmem:[%s1 + $0x4] sm:$0xf]
    %v53 = vld [vmem:[%s2] sm:$0x1]
    %v55 = vlaneseq
    %v56 = vshrl.u32 %v55, 7
    %v57 = vsub.s32 0, %v56
    %v58 = vrot.slane %v53, %v57
    %v68 = vunpack.c.l.b16 %v43
    %v69 = vunpack.c.l.b16 %v44
    %v70 = vunpack.c.l.b16 %v45
    %v71 = vunpack.c.l.b16 %v46
    %v72 = vunpack.c.l.b16 %v47
    %v73 = vunpack.c.l.b16 %v48
    %v74 = vunpack.c.l.b16 %v49
    %v75 = vunpack.c.l.b16 %v50
    %v76 = vpack.c.b16 %v69, %v68
    %v77 = vpack.c.b16 %v71, %v70
    %v78 = vpack.c.b16 %v73, %v72
    %v79 = vpack.c.b16 %v75, %v74
    %v82 = vunpack.c.l.b16 %v51
    %v83 = vunpack.c.l.b16 %v52
    %v84 = vpack.c.b16 %v83, %v82
    %vm86 = vcmask 130048
    %v88 = vsel %vm86, %v76, 0
    %v91 = vsel %vm86, %v77, 0
    %v94 = vsel %vm86, %v78, 0
    %v97 = vsel %vm86, %v79, 0
    %99 = vmatprep.subr.bf16.mxu0 0
    %100 = vmatpush1.bf16.msra.mxu0 %v84
    %101 = vmatprep.subr.bf16.mxu0 0
    %102 = vmatpush1.bf16.msra.mxu0 0
    %103 = vmatprep.subr.bf16.mxu0 0
    %104 = vmatpush1.bf16.msra.mxu0 0
    %105 = vmatprep.subr.bf16.mxu0 0
    %106 = vmatpush1.bf16.msra.mxu0 0
    %107 = vmatprep.subr.bf16.mxu0 0
    %108 = vmatpush1.bf16.msra.mxu0 0
    %109 = vmatprep.subr.bf16.mxu0 0
    %110 = vmatpush1.bf16.msra.mxu0 0
    %111 = vmatprep.subr.bf16.mxu0 0
    %112 = vmatpush1.bf16.msra.mxu0 0
    %113 = vmatprep.subr.bf16.mxu0 0
    %114 = vmatpush1.bf16.msra.mxu0 0
    %115 = vmatprep.subr.bf16.mxu0 0
    %116 = vmatpush1.bf16.msra.mxu0 0
    %117 = vmatprep.subr.bf16.mxu0 0
    %118 = vmatpush1.bf16.msra.mxu0 0
    %119 = vmatprep.subr.bf16.mxu0 0
    %120 = vmatpush1.bf16.msra.mxu0 0
    %121 = vmatprep.subr.bf16.mxu0 0
    %122 = vmatpush1.bf16.msra.mxu0 0
    %123 = vmatprep.subr.bf16.mxu0 0
    %124 = vmatpush1.bf16.msra.mxu0 0
    %125 = vmatprep.subr.bf16.mxu0 0
    %126 = vmatpush1.bf16.msra.mxu0 0
    %127 = vmatprep.subr.bf16.mxu0 0
    %128 = vmatpush1.bf16.msra.mxu0 0
    %129 = vmatprep.subr.bf16.mxu0 0
    %130 = vmatpush1.bf16.msra.mxu0 0
    %131 = vmatprep.mubr.bf16.mxu0 0
    %132 = vmatmul.mubr.bf16.gmra.mrb[0].mxu0 %v88
    %v133 = vpop.f32.mrb[0].mxu0
    %v134 = vadd.f32 %v58, %v133
    %v135 = vpop.f32.mrb[0].mxu0
    %v136 = vpop.f32.mrb[0].mxu0
    %v137 = vadd.f32 %v58, %v136
    %v138 = vpop.f32.mrb[0].mxu0
    %139 = vmatprep.mubr.bf16.mxu0 0
    %140 = vmatmul.mubr.bf16.gmra.mrb[0].mxu0 %v91
    %v141 = vpop.f32.mrb[0].mxu0
    %v142 = vadd.f32 %v58, %v141
    %v143 = vpop.f32.mrb[0].mxu0
    %v144 = vpop.f32.mrb[0].mxu0
    %v145 = vadd.f32 %v58, %v144
    %v146 = vpop.f32.mrb[0].mxu0
    %147 = vmatprep.mubr.bf16.mxu0 0
    %148 = vmatmul.mubr.bf16.gmra.mrb[0].mxu0 %v94
    %v149 = vpop.f32.mrb[0].mxu0
    %v150 = vadd.f32 %v58, %v149
    %v151 = vpop.f32.mrb[0].mxu0
    %v152 = vpop.f32.mrb[0].mxu0
    %v153 = vadd.f32 %v58, %v152
    %v154 = vpop.f32.mrb[0].mxu0
    %155 = vmatprep.mubr.bf16.mxu0 0
    %156 = vmatmul.mubr.bf16.gmra.mrb[0].mxu0 %v97
    %v157 = vpop.f32.mrb[0].mxu0
    %v158 = vadd.f32 %v58, %v157
    %v159 = vpop.f32.mrb[0].mxu0
    %v160 = vpop.f32.mrb[0].mxu0
    %v161 = vadd.f32 %v58, %v160
    %v162 = vpop.f32.mrb[0].mxu0
    %163 = vdwg.mxu0
    %v164 = vld [vmem:[%s3] sm:$0xf]
    %v165 = vld [vmem:[%s3 + $0x4] sm:$0xf]
    %v166 = vld [vmem:[%s3 + $0x8] sm:$0xf]
    %v167 = vld [vmem:[%s3 + $0xc] sm:$0xf]
    %v168 = vld [vmem:[%s3 + $0x10] sm:$0xf]
    %v169 = vld [vmem:[%s3 + $0x14] sm:$0xf]
    %v170 = vld [vmem:[%s3 + $0x18] sm:$0xf]
    %v171 = vld [vmem:[%s3 + $0x1c] sm:$0xf]
    %v172 = vld [vmem:[%s3 + $0x20] sm:$0xf]
    %v173 = vld [vmem:[%s3 + $0x24] sm:$0xf]
    %v174 = vld [vmem:[%s3 + $0x28] sm:$0xf]
    %v175 = vld [vmem:[%s3 + $0x2c] sm:$0xf]
    %v176 = vld [vmem:[%s4] sm:$0xf]
    %v177 = vld [vmem:[%s4 + $0x4] sm:$0xf]
    %v178 = vld [vmem:[%s4 + $0x8] sm:$0xf]
    %v179 = vld [vmem:[%s4 + $0xc] sm:$0xf]
    %v180 = vld [vmem:[%s4 + $0x10] sm:$0xf]
    %v181 = vld [vmem:[%s4 + $0x14] sm:$0xf]
    %v182 = vld [vmem:[%s4 + $0x18] sm:$0xf]
    %v183 = vld [vmem:[%s4 + $0x1c] sm:$0xf]
    %v184 = vld [vmem:[%s5] sm:$0x1]
    %v186 = vlaneseq
    %v187 = vshrl.u32 %v186, 7
    %v188 = vsub.s32 0, %v187
    %v189 = vrot.slane %v184, %v188
    %v203 = vunpack.c.l.b16 %v164
    %v204 = vunpack.c.l.b16 %v165
    %v205 = vunpack.c.l.b16 %v166
    %v206 = vunpack.c.l.b16 %v167
    %v207 = vunpack.c.l.b16 %v168
    %v208 = vunpack.c.l.b16 %v169
    %v209 = vunpack.c.l.b16 %v170
    %v210 = vunpack.c.l.b16 %v171
    %v211 = vunpack.c.l.b16 %v172
    %v212 = vunpack.c.l.b16 %v173
    %v213 = vunpack.c.l.b16 %v174
    %v214 = vunpack.c.l.b16 %v175
    %v215 = vpack.c.b16 %v204, %v203
    %v216 = vpack.c.b16 %v206, %v205
    %v217 = vpack.c.b16 %v208, %v207
    %v218 = vpack.c.b16 %v210, %v209
    %v219 = vpack.c.b16 %v212, %v211
    %v220 = vpack.c.b16 %v214, %v213
    %v229 = vunpack.c.l.b16 %v176
    %v230 = vunpack.c.l.b16 %v177
    %v231 = vunpack.c.l.b16 %v178
    %v232 = vunpack.c.l.b16 %v179
    %v233 = vunpack.c.l.b16 %v180
    %v234 = vunpack.c.l.b16 %v181
    %v235 = vunpack.c.l.b16 %v182
    %v236 = vunpack.c.l.b16 %v183
    %v237 = vpack.c.b16 %v230, %v229
    %v238 = vpack.c.b16 %v232, %v231
    %v239 = vpack.c.b16 %v234, %v233
    %v240 = vpack.c.b16 %v236, %v235
    %vm245 = vcmask 523264
    %v247 = vsel %vm245, %v215, 0
    %v250 = vsel %vm245, %v216, 0
    %v253 = vsel %vm245, %v217, 0
    %v256 = vsel %vm245, %v218, 0
    %v259 = vsel %vm245, %v219, 0
    %v262 = vsel %vm245, %v220, 0
    %264 = vmatprep.subr.bf16.mxu0 0
    %265 = vmatpush1.bf16.msra.mxu0 %v237
    %266 = vmatprep.subr.bf16.mxu0 0
    %267 = vmatpush1.bf16.msra.mxu0 %v238
    %268 = vmatprep.subr.bf16.mxu0 0
    %269 = vmatpush1.bf16.msra.mxu0 %v239
    %270 = vmatprep.subr.bf16.mxu0 0
    %271 = vmatpush1.bf16.msra.mxu0 %v240
    %272 = vmatprep.subr.bf16.mxu0 0
    %273 = vmatpush1.bf16.msra.mxu0 0
    %274 = vmatprep.subr.bf16.mxu0 0
    %275 = vmatpush1.bf16.msra.mxu0 0
    %276 = vmatprep.subr.bf16.mxu0 0
    %277 = vmatpush1.bf16.msra.mxu0 0
    %278 = vmatprep.subr.bf16.mxu0 0
    %279 = vmatpush1.bf16.msra.mxu0 0
    %280 = vmatprep.subr.bf16.mxu0 0
    %281 = vmatpush1.bf16.msra.mxu0 0
    %282 = vmatprep.subr.bf16.mxu0 0
    %283 = vmatpush1.bf16.msra.mxu0 0
    %284 = vmatprep.subr.bf16.mxu0 0
    %285 = vmatpush1.bf16.msra.mxu0 0
    %286 = vmatprep.subr.bf16.mxu0 0
    %287 = vmatpush1.bf16.msra.mxu0 0
    %288 = vmatprep.subr.bf16.mxu0 0
    %289 = vmatpush1.bf16.msra.mxu0 0
    %290 = vmatprep.subr.bf16.mxu0 0
    %291 = vmatpush1.bf16.msra.mxu0 0
    %292 = vmatprep.subr.bf16.mxu0 0
    %293 = vmatpush1.bf16.msra.mxu0 0
    %294 = vmatprep.subr.bf16.mxu0 0
    %295 = vmatpush1.bf16.msra.mxu0 0
    %296 = vmatprep.mubr.bf16.mxu0 0
    %297 = vmatmul.mubr.bf16.gmra.mrb[0].mxu0 %v247
    %v298 = vpop.f32.mrb[0].mxu0
    %v299 = vadd.f32 %v189, %v298
    %v300 = vpop.f32.mrb[0].mxu0
    %v301 = vpop.f32.mrb[0].mxu0
    %v302 = vadd.f32 %v189, %v301
    %v303 = vpop.f32.mrb[0].mxu0
    %304 = vmatprep.mubr.bf16.mxu0 0
    %305 = vmatmul.mubr.bf16.gmra.mrb[0].mxu0 %v250
    %v306 = vpop.f32.mrb[0].mxu0
    %v307 = vadd.f32 %v189, %v306
    %v308 = vpop.f32.mrb[0].mxu0
    %v309 = vpop.f32.mrb[0].mxu0
    %v310 = vadd.f32 %v189, %v309
    %v311 = vpop.f32.mrb[0].mxu0
    %312 = vmatprep.mubr.bf16.mxu0 0
    %313 = vmatmul.mubr.bf16.gmra.mrb[0].mxu0 %v253
    %v314 = vpop.f32.mrb[0].mxu0
    %v315 = vadd.f32 %v189, %v314
    %v316 = vpop.f32.mrb[0].mxu0
    %v317 = vpop.f32.mrb[0].mxu0
    %v318 = vadd.f32 %v189, %v317
    %v319 = vpop.f32.mrb[0].mxu0
    %320 = vmatprep.mubr.bf16.mxu0 0
    %321 = vmatmul.mubr.bf16.gmra.mrb[0].mxu0 %v256
    %v322 = vpop.f32.mrb[0].mxu0
    %v323 = vadd.f32 %v189, %v322
    %v324 = vpop.f32.mrb[0].mxu0
    %v325 = vpop.f32.mrb[0].mxu0
    %v326 = vadd.f32 %v189, %v325
    %v327 = vpop.f32.mrb[0].mxu0
    %328 = vmatprep.mubr.bf16.mxu0 0
    %329 = vmatmul.mubr.bf16.gmra.mrb[0].mxu0 %v259
    %v330 = vpop.f32.mrb[0].mxu0
    %v331 = vadd.f32 %v189, %v330
    %v332 = vpop.f32.mrb[0].mxu0
    %v333 = vpop.f32.mrb[0].mxu0
    %v334 = vadd.f32 %v189, %v333
    %v335 = vpop.f32.mrb[0].mxu0
    %336 = vmatprep.mubr.bf16.mxu0 0
    %337 = vmatmul.mubr.bf16.gmra.mrb[0].mxu0 %v262
    %v338 = vpop.f32.mrb[0].mxu0
    %v339 = vadd.f32 %v189, %v338
    %v340 = vpop.f32.mrb[0].mxu0
    %v341 = vpop.f32.mrb[0].mxu0
    %v342 = vadd.f32 %v189, %v341
    %v343 = vpop.f32.mrb[0].mxu0
    %344 = vdwg.mxu0
    %v345 = vxor.u32 %v299, 2147483648
    %v346 = vxor.u32 %v302, 2147483648
    %v347 = vxor.u32 %v307, 2147483648
    %v348 = vxor.u32 %v310, 2147483648
    %v349 = vxor.u32 %v315, 2147483648
    %v350 = vxor.u32 %v318, 2147483648
    %v351 = vxor.u32 %v323, 2147483648
    %v352 = vxor.u32 %v326, 2147483648
    %v353 = vxor.u32 %v331, 2147483648
    %v354 = vxor.u32 %v334, 2147483648
    %v355 = vxor.u32 %v339, 2147483648
    %v356 = vxor.u32 %v342, 2147483648
    %v357 = vmul.f32 %v345, 1.442695
    %v358 = vpow.pop %v357
    %v359 = vmul.f32 %v346, 1.442695
    %v360 = vpow.pop %v359
    %v361 = vmul.f32 %v347, 1.442695
    %v362 = vpow.pop %v361
    %v363 = vmul.f32 %v348, 1.442695
    %v364 = vpow.pop %v363
    %v365 = vmul.f32 %v349, 1.442695
    %v366 = vpow.pop %v365
    %v367 = vmul.f32 %v350, 1.442695
    %v368 = vpow.pop %v367
    %v369 = vmul.f32 %v351, 1.442695
    %v370 = vpow.pop %v369
    %v371 = vmul.f32 %v352, 1.442695
    %v372 = vpow.pop %v371
    %v373 = vmul.f32 %v353, 1.442695
    %v374 = vpow.pop %v373
    %v375 = vmul.f32 %v354, 1.442695
    %v376 = vpow.pop %v375
    %v377 = vmul.f32 %v355, 1.442695
    %v378 = vpow.pop %v377
    %v379 = vmul.f32 %v356, 1.442695
    %v380 = vpow.pop %v379
    %v381 = vadd.f32 %v358, 1.0
    %v382 = vadd.f32 %v360, 1.0
    %v383 = vadd.f32 %v362, 1.0
    %v384 = vadd.f32 %v364, 1.0
    %v385 = vadd.f32 %v366, 1.0
    %v386 = vadd.f32 %v368, 1.0
    %v387 = vadd.f32 %v370, 1.0
    %v388 = vadd.f32 %v372, 1.0
    %v389 = vadd.f32 %v374, 1.0
    %v390 = vadd.f32 %v376, 1.0
    %v391 = vadd.f32 %v378, 1.0
    %v392 = vadd.f32 %v380, 1.0
    %v393 = vrcp.pop %v381
    %v394 = vmul.f32 1.0, %v393
    %v395 = vrcp.pop %v382
    %v396 = vmul.f32 1.0, %v395
    %v397 = vrcp.pop %v383
    %v398 = vmul.f32 1.0, %v397
    %v399 = vrcp.pop %v384
    %v400 = vmul.f32 1.0, %v399
    %v401 = vrcp.pop %v385
    %v402 = vmul.f32 1.0, %v401
    %v403 = vrcp.pop %v386
    %v404 = vmul.f32 1.0, %v403
    %v405 = vrcp.pop %v387
    %v406 = vmul.f32 1.0, %v405
    %v407 = vrcp.pop %v388
    %v408 = vmul.f32 1.0, %v407
    %v409 = vrcp.pop %v389
    %v410 = vmul.f32 1.0, %v409
    %v411 = vrcp.pop %v390
    %v412 = vmul.f32 1.0, %v411
    %v413 = vrcp.pop %v391
    %v414 = vmul.f32 1.0, %v413
    %v415 = vrcp.pop %v392
    %v416 = vmul.f32 1.0, %v415
    %v417 = vmul.f32 %v394, %v406
    %v418 = vmul.f32 %v396, %v408
    %v419 = vmul.f32 %v398, %v410
    %v420 = vmul.f32 %v400, %v412
    %v421 = vmul.f32 %v402, %v414
    %v422 = vmul.f32 %v404, %v416
    %s423 = sld [smem:[#allocation2]]
    %s424 = sadd.f32 %s423, 1.0
    %v425 = vstv %s424
    %v426 = vmul.f32 %v417, %v425
    %v427 = vmul.f32 %v418, %v425
    %v428 = vmul.f32 %v419, %v425
    %v429 = vmul.f32 %v420, %v425
    %v430 = vmul.f32 %v421, %v425
    %v431 = vmul.f32 %v422, %v425
    %s432 = sld [smem:[#allocation2 + $0x1]]
    %s433 = sadd.f32 %s432, 1.0
    %v434 = vstv %s433
    %v435 = vmul.f32 %v417, %v434
    %v436 = vmul.f32 %v418, %v434
    %v437 = vmul.f32 %v419, %v434
    %v438 = vmul.f32 %v420, %v434
    %v439 = vmul.f32 %v421, %v434
    %v440 = vmul.f32 %v422, %v434
    %447 = vrot.lane.b32.xlu0 %v435, 96
    %v448 = vpop.permute.xlu0 %447
    %449 = vrot.lane.b32.xlu0 %v436, 96
    %v450 = vpop.permute.xlu0 %449
    %451 = vrot.lane.b32.xlu0 %v437, 96
    %v452 = vpop.permute.xlu0 %451
    %453 = vrot.lane.b32.xlu0 %v438, 96
    %v454 = vpop.permute.xlu0 %453
    %455 = vrot.lane.b32.xlu0 %v439, 96
    %v456 = vpop.permute.xlu0 %455
    %457 = vrot.lane.b32.xlu0 %v440, 96
    %v458 = vpop.permute.xlu0 %457
    %v465 = vlaneseq
    %v466 = vshrl.u32 %v465, 7
    %v467 = vadd.s32 %v466, 8
    %v468 = vadd.s32 %v466, 16
    %v469 = vadd.s32 %v466, 24
    %v470 = vadd.s32 %v466, 32
    %v471 = vadd.s32 %v466, 40
    %v472 = vadd.s32 %v466, 48
    %v473 = vadd.s32 %v466, 56
    %v474 = vld [vmem:[%s6] sm:$0x1]
    %v475 = vlaneseq
    %v476 = vshrl.u32 %v475, 7
    %v477 = vsub.s32 0, %v476
    %v478 = vrot.slane %v474, %v477
    %vm479 = vcmp.eq.s32.totalorder %v466, %v478
    %vm480 = vcmp.eq.s32.totalorder %v467, %v478
    %vm481 = vcmp.eq.s32.totalorder %v468, %v478
    %vm482 = vcmp.eq.s32.totalorder %v469, %v478
    %vm483 = vcmp.eq.s32.totalorder %v470, %v478
    %vm484 = vcmp.eq.s32.totalorder %v471, %v478
    %vm485 = vcmp.eq.s32.totalorder %v472, %v478
    %vm486 = vcmp.eq.s32.totalorder %v473, %v478
    %v487 = vsel %vm479, 1, 0
    %v488 = vsel %vm480, 1, 0
    %v489 = vsel %vm481, 1, 0
    %v490 = vsel %vm482, 1, 0
    %v491 = vsel %vm483, 1, 0
    %v492 = vsel %vm484, 1, 0
    %v493 = vsel %vm485, 1, 0
    %v494 = vsel %vm486, 1, 0
    %v495 = vcvt.s32.f32 %v487
    %v496 = vcvt.s32.f32 %v488
    %v497 = vcvt.s32.f32 %v489
    %v498 = vcvt.s32.f32 %v490
    %v499 = vcvt.s32.f32 %v491
    %v500 = vcvt.s32.f32 %v492
    %v501 = vcvt.s32.f32 %v493
    %v502 = vcvt.s32.f32 %v494
    %vm503 = vcmask 785408
    %v505 = vsel %vm503, %v495, 0
    %v508 = vsel %vm503, %v496, 0
    %v511 = vsel %vm503, %v497, 0
    %v514 = vsel %vm503, %v498, 0
    %v517 = vsel %vm503, %v499, 0
    %v520 = vsel %vm503, %v500, 0
    %v523 = vsel %vm503, %v501, 0
    %v526 = vsel %vm503, %v502, 0
    %528 = vmatprep.subr.mxu0 0.0
    %529 = vmatpush1.msra.mxu0 %v426
    %530 = vmatprep.subr.mxu0 0.0
    %531 = vmatpush1.msra.mxu0 %v427
    %532 = vmatprep.subr.mxu0 0.0
    %533 = vmatpush1.msra.mxu0 %v428
    %534 = vmatprep.subr.mxu0 0.0
    %535 = vmatpush1.msra.mxu0 %v429
    %536 = vmatprep.subr.mxu0 0.0
    %537 = vmatpush1.msra.mxu0 %v430
    %538 = vmatprep.subr.mxu0 0.0
    %539 = vmatpush1.msra.mxu0 %v431
    %540 = vmatprep.subr.mxu0 0.0
    %541 = vmatpush1.msra.mxu0 %v448
    %542 = vmatprep.subr.mxu0 0.0
    %543 = vmatpush1.msra.mxu0 %v450
    %544 = vmatprep.subr.mxu0 0.0
    %545 = vmatpush1.msra.mxu0 %v452
    %546 = vmatprep.subr.mxu0 0.0
    %547 = vmatpush1.msra.mxu0 %v454
    %548 = vmatprep.subr.mxu0 0.0
    %549 = vmatpush1.msra.mxu0 %v456
    %550 = vmatprep.subr.mxu0 0.0
    %551 = vmatpush1.msra.mxu0 %v458
    %552 = vmatprep.subr.mxu0 0.0
    %553 = vmatpush1.msra.mxu0 0.0
    %554 = vmatprep.subr.mxu0 0.0
    %555 = vmatpush1.msra.mxu0 0.0
    %556 = vmatprep.subr.mxu0 0.0
    %557 = vmatpush1.msra.mxu0 0.0
    %558 = vmatprep.subr.mxu0 0.0
    %559 = vmatpush1.msra.mxu0 0.0
    %560 = vmatprep.subr.mxu0 0.0
    %561 = vmatpush1.msra.mxu0 0.0
    %562 = vmatprep.subr.mxu0 0.0
    %563 = vmatpush1.msra.mxu0 0.0
    %564 = vmatprep.subr.mxu0 0.0
    %565 = vmatpush1.msra.mxu0 0.0
    %566 = vmatprep.subr.mxu0 0.0
    %567 = vmatpush1.msra.mxu0 0.0
    %568 = vmatprep.subr.mxu0 0.0
    %569 = vmatpush1.msra.mxu0 0.0
    %570 = vmatprep.subr.mxu0 0.0
    %571 = vmatpush1.msra.mxu0 0.0
    %572 = vmatprep.subr.mxu0 0.0
    %573 = vmatpush1.msra.mxu0 0.0
    %574 = vmatprep.subr.mxu0 0.0
    %575 = vmatpush1.msra.mxu0 0.0
    %576 = vmatprep.subr.mxu0 0.0
    %577 = vmatpush1.msra.mxu0 0.0
    %578 = vmatprep.subr.mxu0 0.0
    %579 = vmatpush1.msra.mxu0 0.0
    %580 = vmatprep.subr.mxu0 0.0
    %581 = vmatpush1.msra.mxu0 0.0
    %582 = vmatprep.subr.mxu0 0.0
    %583 = vmatpush1.msra.mxu0 0.0
    %584 = vmatprep.subr.mxu0 0.0
    %585 = vmatpush1.msra.mxu0 0.0
    %586 = vmatprep.subr.mxu0 0.0
    %587 = vmatpush1.msra.mxu0 0.0
    %588 = vmatprep.subr.mxu0 0.0
    %589 = vmatpush1.msra.mxu0 0.0
    %590 = vmatprep.subr.mxu0 0.0
    %591 = vmatpush1.msra.mxu0 0.0
    %592 = vmatprep.mubr.f32.mxu0 0.0
    %593 = vmatmul.mubr.f32.gmra.mrb[0].mxu0 %v505
    %v594 = vpop.f32.mrb[0].mxu0
    %v595 = vadd.f32 0.0, %v594
    %v596 = vpop.f32.mrb[0].mxu0
    %597 = vmatprep.mubr.f32.mxu0 0.0
    %598 = vmatmul.mubr.f32.gmra.mrb[0].mxu0 %v508
    %v599 = vpop.f32.mrb[0].mxu0
    %v600 = vadd.f32 0.0, %v599
    %v601 = vpop.f32.mrb[0].mxu0
    %602 = vmatprep.mubr.f32.mxu0 0.0
    %603 = vmatmul.mubr.f32.gmra.mrb[0].mxu0 %v511
    %v604 = vpop.f32.mrb[0].mxu0
    %v605 = vadd.f32 0.0, %v604
    %v606 = vpop.f32.mrb[0].mxu0
    %607 = vmatprep.mubr.f32.mxu0 0.0
    %608 = vmatmul.mubr.f32.gmra.mrb[0].mxu0 %v514
    %v609 = vpop.f32.mrb[0].mxu0
    %v610 = vadd.f32 0.0, %v609
    %v611 = vpop.f32.mrb[0].mxu0
    %612 = vmatprep.mubr.f32.mxu0 0.0
    %613 = vmatmul.mubr.f32.gmra.mrb[0].mxu0 %v517
    %v614 = vpop.f32.mrb[0].mxu0
    %v615 = vadd.f32 0.0, %v614
    %v616 = vpop.f32.mrb[0].mxu0
    %617 = vmatprep.mubr.f32.mxu0 0.0
    %618 = vmatmul.mubr.f32.gmra.mrb[0].mxu0 %v520
    %v619 = vpop.f32.mrb[0].mxu0
    %v620 = vadd.f32 0.0, %v619
    %v621 = vpop.f32.mrb[0].mxu0
    %622 = vmatprep.mubr.f32.mxu0 0.0
    %623 = vmatmul.mubr.f32.gmra.mrb[0].mxu0 %v523
    %v624 = vpop.f32.mrb[0].mxu0
    %v625 = vadd.f32 0.0, %v624
    %v626 = vpop.f32.mrb[0].mxu0
    %627 = vmatprep.mubr.f32.mxu0 0.0
    %628 = vmatmul.mubr.f32.gmra.mrb[0].mxu0 %v526
    %v629 = vpop.f32.mrb[0].mxu0
    %v630 = vadd.f32 0.0, %v629
    %v631 = vpop.f32.mrb[0].mxu0
    %632 = vdwg.mxu0
    %v633 = vadd.f32 %v134, %v595
    %v634 = vadd.f32 %v137, %v600
    %v635 = vadd.f32 %v142, %v605
    %v636 = vadd.f32 %v145, %v610
    %v637 = vadd.f32 %v150, %v615
    %v638 = vadd.f32 %v153, %v620
    %v639 = vadd.f32 %v158, %v625
    %v640 = vadd.f32 %v161, %v630
    %vm641 = vcmask 261120
    %642 = vst.msk [vmem:[%s8] sm:$0xff] %vm641, %v633
    %643 = vst.msk [vmem:[%s8 + $0x8] sm:$0xff] %vm641, %v634
    %644 = vst.msk [vmem:[%s8 + $0x10] sm:$0xff] %vm641, %v635
    %645 = vst.msk [vmem:[%s8 + $0x18] sm:$0xff] %vm641, %v636
    %646 = vst.msk [vmem:[%s8 + $0x20] sm:$0xff] %vm641, %v637
    %647 = vst.msk [vmem:[%s8 + $0x28] sm:$0xff] %vm641, %v638
    %648 = vst.msk [vmem:[%s8 + $0x30] sm:$0xff] %vm641, %v639
    %649 = vst.msk [vmem:[%s8 + $0x38] sm:$0xff] %vm641, %v640
    // Predicated region
    $region38: #{tpu_custom_call.1} parent=1 // pred_check
      _
    $region39: #{tpu_custom_call.1} parent=1 // pred_check_branch
      %651 = sbr.rel (0) target = $region41
    $region40: #{tpu_custom_call.1} parent=1 // pred_region
      _
    $region41: #{tpu_custom_call.1} parent=1 // pred_fallthru
      _
    // Predicated region
    $region42: #{tpu_custom_call.1} parent=1 // pred_check
      _
    $region43: #{tpu_custom_call.1} parent=1 // pred_check_branch
      %653 = sbr.rel (0) target = $region45
    $region44: #{tpu_custom_call.1} parent=1 // pred_region
      _
    $region45: #{tpu_custom_call.1} parent=1 // pred_fallthru
      _
    %654 = vsyncpa [#allocation3], 1

</llo_original>
